<compile_context>
chip_gen: v5e
topology: v5e:2x2
jax: 0.10.0
libtpu: 0.0.40
codegen_flags: <defaults>
</compile_context>

<pallas_src>
import jax
import jax.numpy as jnp
from jax.experimental import pallas as pl
from jax.experimental.pallas import tpu as pltpu

_EPS = 1e-5


# --------------------------------------------------------------------------- #
# Hardware-aware budgets
# --------------------------------------------------------------------------- #
def _tpu_budgets():
    """(per-block byte budget, VMEM capacity bytes)."""
    try:
        info = pltpu.get_tpu_info()
        vmem_cap = int(getattr(info, "vmem_capacity_bytes", 64 << 20))
    except Exception:  # not on TPU / API shape changed: be conservative
        vmem_cap = 64 << 20
    # v5e / v6e (128 MiB VMEM): ~4 MiB blocks; v7x (64 MiB per TC): ~2 MiB.
    target = (4 << 20) if vmem_cap >= (100 << 20) else (2 << 20)
    return target, vmem_cap


def _vmem_limit(live_block_bytes, vmem_cap):
    # Double-buffered in+out blocks plus slack; never below the 32 MiB scoped
    # default, never above ~3/4 of physical VMEM.
    need = 2 * live_block_bytes + (8 << 20)
    return int(min(vmem_cap * 3 // 4, max(32 << 20, need)))


# --------------------------------------------------------------------------- #
# Single-pass kernel (whole L resident per block)
# --------------------------------------------------------------------------- #
def _mynorm_kernel(x_ref, o_ref):
    # Block: (TB, L, TD). Normalize over axis 1 (L) per (batch, feature).
    # Stats accumulate in f32.  (x - mean) is recomputed in the variance pass
    # and again in the normalize/store pass (each pass streams vregs straight
    # from the pipelined input buffer) so no persistent full-block f32
    # temporary is forced into VMEM and the only full-block store is the
    # final output in its native dtype.
    mean = jnp.mean(x_ref[...], axis=1, keepdims=True, dtype=jnp.float32)
    var = jnp.mean(
        jnp.square(x_ref[...].astype(jnp.float32) - mean), axis=1, keepdims=True
    )  # biased variance
    inv = jax.lax.rsqrt(var + _EPS)
    o_ref[...] = ((x_ref[...].astype(jnp.float32) - mean) * inv).astype(o_ref.dtype)


def _choose_tiles(B, L, D, itemsize, target):
    """Pick (TB, TD) for the single-pass kernel.

    TD: prefer the full feature width (each batch row's DMA is then fully
    contiguous) whenever a (1, L, D) block fits the budget; otherwise the
    largest lane-dense multiple of 128 that fits.

    D <= 128 keeps TD = D (the last block dim must then equal the array dim):
    only D of 128 lanes are used and output stores are masked, so that path is
    VPU/lane-bound rather than HBM-bound.
    # TODO(synk): if small-D 3D shapes become hot, relayout (wrapper transpose
    # or in-kernel segmented reshape) so lanes are dense instead.
    """
    if D <= 128 or L * D * itemsize <= target:
        td = D
    else:
        k = max(1, min(D // 128, target // max(1, L * 128 * itemsize)))
        td = 128 * k
    block_bytes = L * td * itemsize
    tb = max(1, min(B, target // max(1, block_bytes)))
    # Aim for >= 4 grid blocks when possible (2 per TensorCore on v7x so each
    # core still pipelines DMA against compute).
    d_blocks = pl.cdiv(D, td)
    if d_blocks * pl.cdiv(B, tb) < 4 and B > 1:
        want_b = min(B, pl.cdiv(4, d_blocks))
        tb = min(tb, pl.cdiv(B, want_b))
    return tb, td


def _mynorm_3d_single_pass(x, target, vmem_cap):
    B, L, D = x.shape
    itemsize = jnp.dtype(x.dtype).itemsize
    tb, td = _choose_tiles(B, L, D, itemsize, target)
    grid = (pl.cdiv(B, tb), pl.cdiv(D, td))
    block_bytes = tb * L * td * itemsize          # one input block
    nbytes = B * L * D * itemsize
    cost = pl.CostEstimate(
        flops=8 * B * L * D,        # mean / center / square / mean / scale
        transcendentals=B * D,      # one rsqrt per (batch, feature)
        bytes_accessed=2 * nbytes,  # purely HBM-bandwidth bound
    )
    return pl.pallas_call(
        _mynorm_kernel,
        out_shape=jax.ShapeDtypeStruct((B, L, D), x.dtype),
        grid_spec=pltpu.PrefetchScalarGridSpec(
            num_scalar_prefetch=0,
            grid=grid,
            in_specs=[pl.BlockSpec((tb, L, td), lambda b, d: (b, 0, d))],
            out_specs=pl.BlockSpec((tb, L, td), lambda b, d: (b, 0, d)),
        ),
        compiler_params=pltpu.CompilerParams(
            dimension_semantics=("parallel", "parallel"),
            vmem_limit_bytes=_vmem_limit(2 * block_bytes, vmem_cap),
        ),
        cost_estimate=cost,
    )(x)


# --------------------------------------------------------------------------- #
# Long-L fallback: stats pass (L-split accumulators) + normalize pass
# --------------------------------------------------------------------------- #
def _make_stats_kernel(L_total, tl):
    def kernel(x_ref, mean_ref, inv_ref, s_ref, ss_ref):
        l = pl.program_id(2)

        @pl.when(l == 0)
        def _():
            s_ref[...] = jnp.zeros_like(s_ref)
            ss_ref[...] = jnp.zeros_like(ss_ref)

        x = x_ref[...].astype(jnp.float32)
        if L_total % tl != 0:
            # Mask the padded tail of the last L block out of the sums.
            lidx = l * tl + jax.lax.broadcasted_iota(jnp.int32, x.shape, 1)
            x = jnp.where(lidx < L_total, x, 0.0)
        s_ref[...] += jnp.sum(x, axis=1, keepdims=True)
        ss_ref[...] += jnp.sum(x * x, axis=1, keepdims=True)

        @pl.when(l == pl.num_programs(2) - 1)
        def _():
            inv_n = 1.0 / float(L_total)
            mean = s_ref[...] * inv_n
            # var = E[x^2] - mean^2 can catastrophically cancel when
            # |mean| >> std; clamp at 0 so rsqrt stays finite.
            var = jnp.maximum(ss_ref[...] * inv_n - mean * mean, 0.0)
            mean_ref[...] = mean
            inv_ref[...] = jax.lax.rsqrt(var + _EPS)

    return kernel


def _apply_kernel(x_ref, mean_ref, inv_ref, o_ref):
    o_ref[...] = (
        (x_ref[...].astype(jnp.float32) - mean_ref[...]) * inv_ref[...]
    ).astype(o_ref.dtype)


def _mynorm_3d_two_pass(x, target, vmem_cap, tl=None):
    B, L, D = x.shape
    itemsize = jnp.dtype(x.dtype).itemsize

    # Feature tiling: keep full D (contiguous per-row DMA) when an (8, D) slab
    # fits the budget, else lane-dense 128-columns.
    if D <= 128 or 8 * D * itemsize <= target:
        td = D
    else:
        k = max(1, min(D // 128, target // max(1, 8 * 128 * itemsize)))
        td = 128 * k

    if tl is None:
        tl = max(8, (target // max(1, td * itemsize)) // 8 * 8)
    if tl >= L:
        tl = L
    tb = 1

    nb, nd, nl = B, pl.cdiv(D, td), pl.cdiv(L, tl)
    block_bytes = tb * tl * td * itemsize
    nbytes = B * L * D * itemsize
    vmem_lim = _vmem_limit(2 * block_bytes, vmem_cap)

    # Pass 1: per-(batch, feature) mean and rsqrt scale, accumulated over L.
    mean, inv = pl.pallas_call(
        _make_stats_kernel(L, tl),
        out_shape=(
            jax.ShapeDtypeStruct((B, 1, D), jnp.float32),
            jax.ShapeDtypeStruct((B, 1, D), jnp.float32),
        ),
        grid_spec=pltpu.PrefetchScalarGridSpec(
            num_scalar_prefetch=0,
            grid=(nb, nd, nl),
            in_specs=[pl.BlockSpec((tb, tl, td), lambda b, d, l: (b, l, d))],
            out_specs=[
                pl.BlockSpec((tb, 1, td), lambda b, d, l: (b, 0, d)),
                pl.BlockSpec((tb, 1, td), lambda b, d, l: (b, 0, d)),
            ],
            scratch_shapes=[
                pltpu.VMEM((tb, 1, td), jnp.float32),
                pltpu.VMEM((tb, 1, td), jnp.float32),
            ],
        ),
        compiler_params=pltpu.CompilerParams(
            dimension_semantics=("parallel", "parallel", "arbitrary"),
            vmem_limit_bytes=vmem_lim,
        ),
        cost_estimate=pl.CostEstimate(
            flops=3 * B * L * D, transcendentals=B * D, bytes_accessed=nbytes
        ),
    )(x)

    # Pass 2: elementwise normalize.
    return pl.pallas_call(
        _apply_kernel,
        out_shape=jax.ShapeDtypeStruct((B, L, D), x.dtype),
        grid_spec=pltpu.PrefetchScalarGridSpec(
            num_scalar_prefetch=0,
            grid=(nb, nd, nl),
            in_specs=[
                pl.BlockSpec((tb, tl, td), lambda b, d, l: (b, l, d)),
                pl.BlockSpec((tb, 1, td), lambda b, d, l: (b, 0, d)),
                pl.BlockSpec((tb, 1, td), lambda b, d, l: (b, 0, d)),
            ],
            out_specs=pl.BlockSpec((tb, tl, td), lambda b, d, l: (b, l, d)),
        ),
        compiler_params=pltpu.CompilerParams(
            dimension_semantics=("parallel", "parallel", "parallel"),
            vmem_limit_bytes=vmem_lim,
        ),
        cost_estimate=pl.CostEstimate(
            flops=2 * B * L * D, transcendentals=0, bytes_accessed=2 * nbytes
        ),
    )(x, mean, inv)


# --------------------------------------------------------------------------- #
# Dispatcher + module wrapper
# --------------------------------------------------------------------------- #
def _mynorm_3d(x, *, force_l_split=False, l_block=None):
    """x: (B, L, D) -> instance-norm over L for each (B, D)."""
    B, L, D = x.shape
    itemsize = jnp.dtype(x.dtype).itemsize
    target, vmem_cap = _tpu_budgets()
    td_min = D if D <= 128 else 128
    if force_l_split or L * td_min * itemsize > target:
        return _mynorm_3d_two_pass(x, target, vmem_cap, tl=l_block)
    return _mynorm_3d_single_pass(x, target, vmem_cap)


class MyNorm1dPallas:
    def __init__(self, dim):
        self.dim = dim
        # Present in the PyTorch module but never applied in forward().
        self.bias = jnp.zeros((dim,), dtype=jnp.float32)
        self.weight = jnp.ones((dim,), dtype=jnp.float32)

    def __call__(self, x):
        if x.ndim == 3:
            # (B, L, dim): normalize over L per (batch, feature).
            return _mynorm_3d(x)
        if x.ndim == 2:
            # (B, dim): InstanceNorm1d sees (dim, B) -> each feature is
            # normalized over the batch axis.  Zero-cost reshape puts B on the
            # reduction (sublane) axis and dim on lanes.
            B, dim = x.shape
            return _mynorm_3d(x.reshape(1, B, dim)).reshape(B, dim)
        raise ValueError("MyNorm1d expects 2D or 3D input")


# --------------------------------------------------------------------------- #
# Self-test
# --------------------------------------------------------------------------- #
def _ref(x3):
    xf = x3.astype(jnp.float32)
    mean = jnp.mean(xf, axis=1, keepdims=True)
    var = jnp.mean((xf - mean) ** 2, axis=1, keepdims=True)
    return (xf - mean) / jnp.sqrt(var + _EPS)


if __name__ == "__main__":
    key = jax.random.PRNGKey(0)
    k1, k2, k3, k4 = jax.random.split(key, 4)

    # 3D, narrow features (dim < 128): (B, L, dim) = (2, 16, 32)
    dim = 32
    mod = MyNorm1dPallas(dim)
    x3 = jax.random.normal(k1, (2, 16, dim), dtype=jnp.float32)
    y3 = jax.block_until_ready(mod(x3))
    assert jnp.allclose(y3, _ref(x3).astype(x3.dtype), atol=1e-5, rtol=1e-5)

    # 2D: (B, dim) = (8, 32) -> normalize over the batch axis per feature.
    x2 = jax.random.normal(k2, (8, dim), dtype=jnp.float32)
    y2 = jax.block_until_ready(mod(x2))
    ref2 = _ref(x2.reshape(1, 8, dim)).reshape(8, dim).astype(x2.dtype)
    assert jnp.allclose(y2, ref2, atol=1e-5, rtol=1e-5)

    # 3D, lane-dense feature tiling, bf16 input (single-pass path).
    mod256 = MyNorm1dPallas(256)
    xb = jax.random.normal(k3, (4, 64, 256), dtype=jnp.float32).astype(jnp.bfloat16)
    yb = jax.block_until_ready(mod256(xb))
    assert jnp.allclose(yb.astype(jnp.float32), _ref(xb), atol=3e-2, rtol=3e-2)

    # Long-L fallback path (forced, small shape): L-split accumulators with a
    # ragged last L block (72 % 16 != 0 exercises the tail mask).
    xs = jax.random.normal(k4, (2, 72, 256), dtype=jnp.float32)
    ys = jax.block_until_ready(_mynorm_3d(xs, force_l_split=True, l_block=16))
    assert jnp.allclose(ys, _ref(xs).astype(xs.dtype), atol=1e-4, rtol=1e-4)

    print("KERNEL_OK")
</pallas_src>

<mosaic_0001>
module attributes {stable_mosaic.version = 11 : i64} {
  func.func @_mynorm_kernel(%arg0: i32, %arg1: i32, %arg2: memref<1x16x32xf32, #tpu.memory_space<vmem>>, %arg3: memref<1x16x32xf32, #tpu.memory_space<vmem>>) attributes {dimension_semantics = [#tpu.dimension_semantics<parallel>, #tpu.dimension_semantics<parallel>], iteration_bounds = array<i64: 2, 1>, scalar_prefetch = 0 : i64, scratch_operands = 0 : i64, tpu.core_type = #tpu.core_type<tc>, window_params = [{transform_indices = @transform_0, window_bounds = array<i64: 1, 16, 32>}, {transform_indices = @transform_1, window_bounds = array<i64: 1, 16, 32>}]} {
    %c0 = arith.constant 0 : index
    %c0_0 = arith.constant 0 : index
    %c0_1 = arith.constant 0 : index
    %0 = vector.load %arg2[%c0, %c0_0, %c0_1] : memref<1x16x32xf32, #tpu.memory_space<vmem>>, vector<1x16x32xf32>
    %cst = arith.constant dense<0.000000e+00> : vector<1x32xf32>
    %1 = vector.multi_reduction <add>, %0, %cst [1] : vector<1x16x32xf32> to vector<1x32xf32>
    %2 = vector.shape_cast %1 : vector<1x32xf32> to vector<1x1x32xf32>
    %cst_2 = arith.constant 1.600000e+01 : f32
    %3 = vector.broadcast %cst_2 : f32 to vector<1x1x32xf32>
    %4 = arith.divf %2, %3 : vector<1x1x32xf32>
    %c0_3 = arith.constant 0 : index
    %c0_4 = arith.constant 0 : index
    %c0_5 = arith.constant 0 : index
    %5 = vector.load %arg2[%c0_3, %c0_4, %c0_5] : memref<1x16x32xf32, #tpu.memory_space<vmem>>, vector<1x16x32xf32>
    %6 = vector.broadcast %4 : vector<1x1x32xf32> to vector<1x16x32xf32>
    %7 = arith.subf %5, %6 : vector<1x16x32xf32>
    %8 = arith.mulf %7, %7 : vector<1x16x32xf32>
    %cst_6 = arith.constant dense<0.000000e+00> : vector<1x32xf32>
    %9 = vector.multi_reduction <add>, %8, %cst_6 [1] : vector<1x16x32xf32> to vector<1x32xf32>
    %10 = vector.shape_cast %9 : vector<1x32xf32> to vector<1x1x32xf32>
    %cst_7 = arith.constant 1.600000e+01 : f32
    %11 = vector.broadcast %cst_7 : f32 to vector<1x1x32xf32>
    %12 = arith.divf %10, %11 : vector<1x1x32xf32>
    %cst_8 = arith.constant 9.99999974E-6 : f32
    %13 = vector.broadcast %cst_8 : f32 to vector<1x1x32xf32>
    %14 = arith.addf %12, %13 : vector<1x1x32xf32>
    %15 = math.rsqrt %14 : vector<1x1x32xf32>
    %c0_9 = arith.constant 0 : index
    %c0_10 = arith.constant 0 : index
    %c0_11 = arith.constant 0 : index
    %16 = vector.load %arg2[%c0_9, %c0_10, %c0_11] : memref<1x16x32xf32, #tpu.memory_space<vmem>>, vector<1x16x32xf32>
    %17 = vector.broadcast %4 : vector<1x1x32xf32> to vector<1x16x32xf32>
    %18 = arith.subf %16, %17 : vector<1x16x32xf32>
    %19 = vector.broadcast %15 : vector<1x1x32xf32> to vector<1x16x32xf32>
    %20 = arith.mulf %18, %19 : vector<1x16x32xf32>
    %c0_12 = arith.constant 0 : index
    %c0_13 = arith.constant 0 : index
    %c0_14 = arith.constant 0 : index
    %21 = vector.load %arg3[%c0_12, %c0_13, %c0_14] : memref<1x16x32xf32, #tpu.memory_space<vmem>>, vector<1x16x32xf32>
    tpu.vector_store %arg3[%c0_12, %c0_13, %c0_14], %20 {strides = array<i32>} : memref<1x16x32xf32, #tpu.memory_space<vmem>>, vector<1x16x32xf32>,
    return
  }
  func.func @transform_0(%arg0: i32, %arg1: i32) -> (i32, i32, i32) {
    %c0_i32 = arith.constant 0 : i32
    %c0_i32_0 = arith.constant 0 : i32
    return %arg0, %c0_i32, %arg1 : i32, i32, i32
  }
  func.func @transform_1(%arg0: i32, %arg1: i32) -> (i32, i32, i32) {
    %c0_i32 = arith.constant 0 : i32
    %c0_i32_0 = arith.constant 0 : i32
    return %arg0, %c0_i32, %arg1 : i32, i32, i32
  }
}

</mosaic_0001>

<llo_original>
// kernel: tpu_custom_call.1
$region0: #{tpu_custom_call.1}
  #allocation0 [shape = 'u32[]', space=smem, size = 0x4, offset = 0x4, fixed_abs, tag = 'smem constant byte address 0x4 - core index']
  #allocation1 [shape = 'u32[72,128]{1,0:T(1,128)}', space=vmem, size = 0x9000, scoped, tag = 'internal scratch']
  %s0 = inlined_call_operand.hbm [shape: f32[2,16,32], index: 0, kind: input, shape index: {}]
  %s1 = inlined_call_operand.hbm [shape: f32[2,16,32], index: 1, kind: output, shape index: {}]
  %s2 = sld [smem:[#allocation0]]
  $region41: #{tpu_custom_call.1} parent=0
    _
  %s4 = ssub.s32 1, %s2
  %s5 = scalar_select 0, %s4, %s2
  $region1: #{tpu_custom_call.1} parent=0
    #allocation2 [shape = 'u8[16384]{0}', space=vmem, size = 0x4000, scoped, tag = 'input window, operand 0']
    #allocation3 [shape = 's32[2]{0}', space=sflag, size = 0x8, scoped, tag = 'scoped memory for tpu_custom_call.1']
    #allocation4 [shape = 's32[2]{0}', space=sflag, size = 0x8, scoped, tag = 'scoped memory for tpu_custom_call.1']
    #allocation5 [shape = 'u8[16384]{0}', space=vmem, size = 0x4000, scoped, tag = 'output window, operand 0']
    %6 = vsyncpa [#allocation3], 0
    %s7 = scalar_lea.sflag [#allocation3], 1
    %8 = vsyncpa %s7, 0
    %9 = vsyncpa [#allocation4], 0
    %s10 = scalar_lea.sflag [#allocation4], 1
    %11 = vsyncpa %s10, 0
    loop: start=0, step=1, limit=4
    $region2: #{tpu_custom_call.1} parent=1 // loop_pre_header
      _
    $region3: #{tpu_custom_call.1} parent=1 // loop_header
      %s13 = sphi 0, %s17
      %p14 = scmp.ge.s32.totalorder %s13, 4
      %s20 = sphi 0, %s32
      %s21 = sphi 0, %s28
      %s22 = sphi 0, %s20
      %s23 = sphi 0, %s21
      %s24 = sphi 0, %s22
      %s25 = sphi 0, %s23
      %s37 = sphi 0, %s39
      %s40 = sphi 0, %s37
      %s41 = sphi 0, %s40
      %s57 = sphi 0, %s41
      %s65 = sphi 0, %s67
      %s68 = sphi 0, %s65
      %s69 = sphi 0, %s68
      %s85 = sphi 0, %s69
    $region4: #{tpu_custom_call.1} parent=1 // loop_header_branch
      %16 = sbr.rel (%p14) target = $region8
    $region5: #{tpu_custom_call.1} parent=1 // loop_body
      %s18 = ssub.s32 %s13, 1
      %s19 = ssub.s32 %s13, 2
      %s26 = sadd.s32 1, %s21
      %p27 = scmp.ge.s32.totalorder %s26, 1
      %s28 = scalar_select %p27, 0, %s26
      %s29 = sadd.s32 1, %s20
      %s30 = scalar_select %p27, %s29, %s20
      %p31 = scmp.ge.s32.totalorder %s30, 2
      %s32 = scalar_select %p31, 0, %s30
      %s33 = ssub.s32 %s20, %s32
      %s34 = ssub.s32 %s21, %s28
      %s35 = sor.u32 %s33, %s34
      %p36 = scmp.eq.s32.totalorder %s35, 0
      %s38 = sadd.s32 %s37, 1
      %s39 = scalar_select %p36, %s37, %s38
      %p42 = pneg %p36
      %p43 = scmp.eq.s32.totalorder %s13, 1
      %p44 = por %p42, %p43
      %p45 = scmp.ne.s32.totalorder %s37, %s40
      %p46 = scmp.eq.s32.totalorder %s13, 0
      %p47 = por %p45, %p46
      %p48 = scmp.ne.s32.totalorder %s37, %s40
      %p49 = scmp.eq.s32.totalorder %s18, 1
      %p50 = por %p48, %p49
      %p51 = scmp.ne.s32.totalorder %s40, %s41
      %p52 = scmp.eq.s32.totalorder %s18, 0
      %p53 = por %p51, %p52
      %p54 = scmp.ne.s32.totalorder %s40, %s41
      %p55 = scmp.eq.s32.totalorder %s19, 1
      %p56 = por %p54, %p55
      %p58 = scmp.ne.s32.totalorder %s41, %s57
      %p59 = scmp.eq.s32.totalorder %s19, 0
      %p60 = por %p58, %p59
      %s61 = ssub.s32 %s20, %s32
      %s62 = ssub.s32 %s21, %s28
      %s63 = sor.u32 %s61, %s62
      %p64 = scmp.eq.s32.totalorder %s63, 0
      %s66 = sadd.s32 %s65, 1
      %s67 = scalar_select %p64, %s65, %s66
      %p70 = pneg %p64
      %p71 = scmp.eq.s32.totalorder %s13, 1
      %p72 = por %p70, %p71
      %p73 = scmp.ne.s32.totalorder %s65, %s68
      %p74 = scmp.eq.s32.totalorder %s13, 0
      %p75 = por %p73, %p74
      %p76 = scmp.ne.s32.totalorder %s65, %s68
      %p77 = scmp.eq.s32.totalorder %s18, 1
      %p78 = por %p76, %p77
      %p79 = scmp.ne.s32.totalorder %s68, %s69
      %p80 = scmp.eq.s32.totalorder %s18, 0
      %p81 = por %p79, %p80
      %p82 = scmp.ne.s32.totalorder %s68, %s69
      %p83 = scmp.eq.s32.totalorder %s19, 1
      %p84 = por %p82, %p83
      %p86 = scmp.ne.s32.totalorder %s69, %s85
      %p87 = scmp.eq.s32.totalorder %s19, 0
      %p88 = por %p86, %p87
      %p89 = scmp.le.s32.totalorder 1, %s13
      %p90 = scmp.lt.s32.totalorder %s13, 3
      %p91 = pnand %p89, %p90
      %p92 = pneg %p91
      // Predicated region
      $region9: #{tpu_custom_call.1} parent=5 // pred_check
        _
      $region10: #{tpu_custom_call.1} parent=5 // pred_check_branch
        %94 = sbr.rel (%p91) target = $region12
      $region11: #{tpu_custom_call.1} parent=5 // pred_region
        %s95 = ssub.s32 %s13, 1
      $region12: #{tpu_custom_call.1} parent=5 // pred_fallthru
        _
      %p96 = scmp.lt.s32.totalorder %s13, 2
      // Predicated region
      $region13: #{tpu_custom_call.1} parent=5 // pred_check
        %p97 = pneg %p96
      $region14: #{tpu_custom_call.1} parent=5 // pred_check_branch
        %99 = sbr.rel (%p97) target = $region16
      $region15: #{tpu_custom_call.1} parent=5 // pred_region
        // Predicated region
        $region17: #{tpu_custom_call.1} parent=15 // pred_check
          %p100 = pneg %p47
        $region18: #{tpu_custom_call.1} parent=15 // pred_check_branch
          %102 = sbr.rel (%p100) target = $region20
        $region19: #{tpu_custom_call.1} parent=15 // pred_region
          %s103 = sand.u32 %s37, 1
          %s104 = scalar_lea.sflag [#allocation3], %s103
          %s105 = sand.u32 %s37, 1
          %s106 = smul.addr %s105, 16
          %s107 = scalar_lea.vmem [#allocation2], %s106
          %109 = vsyncadd %s104, 0
          %s110 = smul.addr %s20, 2
          %s111 = sadd.s32 %s21, %s110
          %s112 = smul.addr %s111, 8
          %s113 = scalar_lea.hbm %s0, %s112
          %s114 = sshll.u32 %s113, 4
          %s115 = int_to_ptr.hbm [resolvable:$true] %s114
          %s116 = sshll.u32 %s107, 4
          %s117 = int_to_ptr.vmem [resolvable:$true] %s116
          %122 = dma.hbm_to_vmem [thread:$0]  %s115, 256, %s117, %s104, 128, 128, 8
        $region20: #{tpu_custom_call.1} parent=15 // pred_fallthru
          _
      $region16: #{tpu_custom_call.1} parent=5 // pred_fallthru
        _
      %p123 = scmp.le.s32.totalorder 1, %s13
      %p124 = scmp.lt.s32.totalorder %s13, 3
      %p125 = pnand %p123, %p124
      %p126 = pneg %p125
      // Predicated region
      $region21: #{tpu_custom_call.1} parent=5 // pred_check
        _
      $region22: #{tpu_custom_call.1} parent=5 // pred_check_branch
        %128 = sbr.rel (%p125) target = $region24
      $region23: #{tpu_custom_call.1} parent=5 // pred_region
        %s129 = ssub.s32 %s13, 1
        %s130 = sand.u32 %s40, 1
        %s131 = scalar_lea.sflag [#allocation3], %s130
        %s132 = sand.u32 %s40, 1
        %s133 = smul.addr %s132, 16
        %s134 = scalar_lea.vmem [#allocation2], %s133
        // Predicated region
        $region25: #{tpu_custom_call.1} parent=23 // pred_check
          %p135 = pneg %p53
        $region26: #{tpu_custom_call.1} parent=23 // pred_check_branch
          %137 = sbr.rel (%p135) target = $region28
        $region27: #{tpu_custom_call.1} parent=23 // pred_region
          %139 = dma.done %s131, 256
        $region28: #{tpu_custom_call.1} parent=23 // pred_fallthru
          _
        %s140 = sand.u32 %s40, 1
        %s141 = scalar_lea.sflag [#allocation3], %s140
        %s142 = sand.u32 %s40, 1
        %s143 = smul.addr %s142, 16
        %s144 = scalar_lea.vmem [#allocation2], %s143
        %p145 = pneg %p53
        %p146 = pneg %p50
        %p147 = pneg %p81
        %p148 = pneg %p78
        %s149 = sand.u32 %s68, 1
        %s150 = scalar_lea.sflag [#allocation4], %s149
        %s151 = sand.u32 %s68, 1
        %s152 = smul.addr %s151, 16
        %s153 = scalar_lea.vmem [#allocation5], %s152
        %v154 = vld [vmem:[%s134] sm:$0xff]
        %v155 = vld [vmem:[%s134 + $0x8] sm:$0xff]
        %vm156 = vcmask 261120
        %v157 = vsel %vm156, %v154, 0.0
        %v158 = vsel %vm156, %v155, 0.0
        %v159 = vadd.f32 %v157, %v158
        %v160 = vrot.slane %v159, 4
        %v161 = vadd.f32 %v159, %v160
        %v162 = vrot.slane %v161, 2
        %v163 = vadd.f32 %v161, %v162
        %v164 = vrot.slane %v163, 1
        %v165 = vadd.f32 %v163, %v164
        %v166 = vrcp.pop 16.0
        %v167 = vmul.f32 16.0, %v166
        %v168 = vsub.f32 1.0, %v167
        %v169 = vmul.f32 %v166, %v168
        %v170 = vadd.f32 %v166, %v169
        %vm171 = vweird.f32 %v166
        %v172 = vsel %vm171, %v166, %v170
        %v173 = vmul.f32 %v165, %v172
        %v174 = vsub.f32 %v154, %v173
        %v175 = vsub.f32 %v155, %v173
        %v176 = vmul.f32 %v174, %v174
        %v177 = vmul.f32 %v175, %v175
        %v178 = vsel %vm156, %v176, 0.0
        %v179 = vsel %vm156, %v177, 0.0
        %v180 = vadd.f32 %v178, %v179
        %v181 = vrot.slane %v180, 4
        %v182 = vadd.f32 %v180, %v181
        %v183 = vrot.slane %v182, 2
        %v184 = vadd.f32 %v182, %v183
        %v185 = vrot.slane %v184, 1
        %v186 = vadd.f32 %v184, %v185
        %v187 = vmul.f32 %v186, %v172
        %v188 = vadd.f32 %v187, 1e-05
        %v189 = vrsqrt.pop %v188
        %v190 = vmul.f32 %v189, %v188
        %v191 = vmul.f32 %v190, %v189
        %v192 = vmul.f32 0.5, %v191
        %v193 = vsub.f32 1.5, %v192
        %v194 = vmul.f32 %v189, %v193
        %vm195 = vweird.f32 %v188
        %vm196 = vweird.f32 %v189
        %vm197 = vmor %vm195, %vm196
        %v198 = vsel %vm197, %v189, %v194
        %v199 = vmul.f32 %v174, %v198
        %v200 = vmul.f32 %v175, %v198
        %201 = vst.msk [vmem:[%s153] sm:$0xff] %vm156, %v199
        %202 = vst.msk [vmem:[%s153 + $0x8] sm:$0xff] %vm156, %v200
        %s203 = sand.u32 %s68, 1
        %s204 = scalar_lea.sflag [#allocation4], %s203
        %s205 = sand.u32 %s68, 1
        %s206 = smul.addr %s205, 16
        %s207 = scalar_lea.vmem [#allocation5], %s206
        // Predicated region
        $region29: #{tpu_custom_call.1} parent=23 // pred_check
          %p208 = pneg %p78
        $region30: #{tpu_custom_call.1} parent=23 // pred_check_branch
          %210 = sbr.rel (%p208) target = $region32
        $region31: #{tpu_custom_call.1} parent=23 // pred_region
          %212 = vsyncadd %s204, 0
          %s213 = smul.addr %s22, 2
          %s214 = sadd.s32 %s23, %s213
          %s215 = smul.addr %s214, 8
          %s216 = scalar_lea.hbm %s1, %s215
          %s217 = sshll.u32 %s207, 4
          %s218 = int_to_ptr.vmem [resolvable:$true] %s217
          %s219 = sshll.u32 %s216, 4
          %s220 = int_to_ptr.hbm [resolvable:$true] %s219
          %225 = dma.vmem_to_hbm [thread:$0]  %s218, 256, %s220, %s204, 128, 128, 8
        $region32: #{tpu_custom_call.1} parent=23 // pred_fallthru
          _
      $region24: #{tpu_custom_call.1} parent=5 // pred_fallthru
        _
      %p226 = scmp.le.s32.totalorder 2, %s13
      // Predicated region
      $region33: #{tpu_custom_call.1} parent=5 // pred_check
        %p227 = pneg %p226
      $region34: #{tpu_custom_call.1} parent=5 // pred_check_branch
        %229 = sbr.rel (%p227) target = $region36
      $region35: #{tpu_custom_call.1} parent=5 // pred_region
        %s230 = ssub.s32 %s13, 2
        // Predicated region
        $region37: #{tpu_custom_call.1} parent=35 // pred_check
          %p231 = pneg %p84
        $region38: #{tpu_custom_call.1} parent=35 // pred_check_branch
          %233 = sbr.rel (%p231) target = $region40
        $region39: #{tpu_custom_call.1} parent=35 // pred_region
          %s234 = sand.u32 %s69, 1
          %s235 = scalar_lea.sflag [#allocation4], %s234
          %s236 = sand.u32 %s69, 1
          %s237 = smul.addr %s236, 16
          %s238 = scalar_lea.vmem [#allocation5], %s237
          %240 = dma.done %s235, 256
        $region40: #{tpu_custom_call.1} parent=35 // pred_fallthru
          _
      $region36: #{tpu_custom_call.1} parent=5 // pred_fallthru
        _
    $region6: #{tpu_custom_call.1} parent=1 // loop_footer
      %s17 = sadd.s32 1, %s13
    $region7: #{tpu_custom_call.1} parent=1 // loop_footer_branch
      %12 = sbr.rel target = $region3
    $region8: #{tpu_custom_call.1} parent=1 // loop_exit
      _
    %241 = vsyncpa [#allocation3], 1
    %s242 = scalar_lea.sflag [#allocation3], 1
    %243 = vsyncpa %s242, 1
    %244 = vsyncpa [#allocation4], 1
    %s245 = scalar_lea.sflag [#allocation4], 1
    %246 = vsyncpa %s245, 1

</llo_original>
